<compile_context>
chip_gen: v6e
topology: v6e:2x2x1
jax: 0.10.0
libtpu: 0.0.40
codegen_flags: <defaults>
</compile_context>

<pallas_src>
import functools

import jax
import jax.numpy as jnp
from jax.experimental import pallas as pl
from jax.experimental.pallas import tpu as pltpu


# --------------------------------------------------------------------------- #
# Kernel                                                                      #
# --------------------------------------------------------------------------- #
def _spectral_mul_kernel(x_ref, w_ref, o_ref, *, cin, cout):
    """Complex channel contraction, modes on lanes, VPU broadcast-FMA.

    x_ref: (B,   2*Cin,  Mblk)  rows [0:Cin]  = Re(x_ft),  [Cin:2Cin]   = Im(x_ft)
    w_ref: (Cin, 2*Cout, Mblk)  rows [0:Cout] = Re(w),     [Cout:2Cout] = Im(w)
    o_ref: (B,   2*Cout, Mblk)  rows [0:Cout] = Re(out),   [Cout:2Cout] = Im(out)
    """
    x = x_ref[...]
    w = w_ref[...]
    b = x.shape[0]
    mblk = x.shape[-1]

    acc_re = jnp.zeros((b, cout, mblk), jnp.float32)
    acc_im = jnp.zeros((b, cout, mblk), jnp.float32)

    # Static loop over input channels; each step is a lane-dense broadcast-FMA
    # (B,1,M) x (1,Cout,M) -> (B,Cout,M).  Keeps intermediates at output size.
    for i in range(cin):
        xr_i = x[:, i:i + 1, :]                 # (B, 1, Mblk)  Re
        xi_i = x[:, cin + i:cin + i + 1, :]     # (B, 1, Mblk)  Im
        wr_i = w[i:i + 1, :cout, :]             # (1, Cout, Mblk)  Re
        wi_i = w[i:i + 1, cout:, :]             # (1, Cout, Mblk)  Im
        acc_re = acc_re + xr_i * wr_i - xi_i * wi_i
        acc_im = acc_im + xr_i * wi_i + xi_i * wr_i

    # Single full-tile (sublane+lane dense) store.
    o_ref[...] = jnp.concatenate([acc_re, acc_im], axis=1).astype(o_ref.dtype)


# --------------------------------------------------------------------------- #
# Wrapper                                                                     #
# --------------------------------------------------------------------------- #
def _round_up(x, m):
    return ((x + m - 1) // m) * m


def _vmem_capacity_bytes():
    try:
        cap = getattr(pltpu.get_tpu_info(), "vmem_capacity_bytes", None)
        if cap:
            return int(cap)
    except Exception:
        pass
    return 64 << 20  # conservative fallback (v7x physical VMEM)


def _pick_mode_block(mpad, per_lane_bytes, vmem_cap):
    """Largest 128-multiple divisor of mpad whose per-step footprint fits a
    generation-aware budget; capped at mpad//2 (when possible) so the grid
    has >=2 steps for v7x megacore sharding and DMA/compute pipelining."""
    budget = vmem_cap // 8                      # leaves room for double-buffering
    max_lanes = max(128, (budget // max(per_lane_bytes, 1)) // 128 * 128)
    if mpad >= 256:
        max_lanes = min(max_lanes, mpad // 2)
    blk = 128
    cand = 128
    while cand <= min(mpad, max_lanes):
        if mpad % cand == 0:
            blk = cand
        cand += 128
    return blk


def spectral_mul_pallas(xs, ws, cin, cout):
    """out[b,o,m] = sum_i x[b,i,m] * w[i,o,m]  (complex, packed real/imag).

    xs : (B, 2*Cin,  Mpad) float32  (Mpad a multiple of 128, zero padded)
    ws : (Cin, 2*Cout, Mpad) float32
    ->   (B, 2*Cout, Mpad) float32
    """
    b = xs.shape[0]
    mpad = xs.shape[-1]

    per_lane_bytes = 4 * (b * 2 * cin + cin * 2 * cout + b * 2 * cout)
    vmem_cap = _vmem_capacity_bytes()
    mblk = _pick_mode_block(mpad, per_lane_bytes, vmem_cap)
    vmem_limit = int(min(vmem_cap // 2, 64 << 20))

    flops = 8 * b * cin * cout * mpad
    bytes_accessed = 4 * (xs.size + ws.size + b * 2 * cout * mpad)

    out = pl.pallas_call(
        functools.partial(_spectral_mul_kernel, cin=cin, cout=cout),
        out_shape=jax.ShapeDtypeStruct((b, 2 * cout, mpad), jnp.float32),
        grid_spec=pltpu.PrefetchScalarGridSpec(
            num_scalar_prefetch=0,
            grid=(mpad // mblk,),
            in_specs=[
                pl.BlockSpec((b, 2 * cin, mblk), lambda m: (0, 0, m)),
                pl.BlockSpec((cin, 2 * cout, mblk), lambda m: (0, 0, m)),
            ],
            out_specs=pl.BlockSpec((b, 2 * cout, mblk), lambda m: (0, 0, m)),
        ),
        compiler_params=pltpu.CompilerParams(
            # Disjoint output mode-tiles -> shardable across v7x TensorCores.
            dimension_semantics=("parallel",),
            vmem_limit_bytes=vmem_limit,
        ),
        cost_estimate=pl.CostEstimate(
            flops=flops, transcendentals=0, bytes_accessed=bytes_accessed),
    )(xs, ws)
    return out


# --------------------------------------------------------------------------- #
# Module                                                                      #
# --------------------------------------------------------------------------- #
class SpectralConv2d:
    """JAX/Pallas re-implementation of the PyTorch SpectralConv2d module."""

    def __init__(self, in_channels, out_channels, modes1, modes2, key):
        self.in_channels = in_channels
        self.out_channels = out_channels
        self.modes1 = modes1
        self.modes2 = modes2
        scale = 1.0 / (in_channels * out_channels)
        k1, k2, k3, k4 = jax.random.split(key, 4)
        shape = (in_channels, out_channels, modes1, modes2)
        # torch.rand(..., dtype=cfloat): real & imag ~ U[0,1)
        self.weights1 = scale * (
            jax.random.uniform(k1, shape, jnp.float32)
            + 1j * jax.random.uniform(k2, shape, jnp.float32)
        ).astype(jnp.complex64)
        self.weights2 = scale * (
            jax.random.uniform(k3, shape, jnp.float32)
            + 1j * jax.random.uniform(k4, shape, jnp.float32)
        ).astype(jnp.complex64)

        # Pack weights ONCE for the kernel: modes on lanes (padded to 128),
        # real/imag folded into the sublane axis.  Per-call transposes gone.
        self._num_modes = 2 * modes1 * modes2
        self._mpad = _round_up(self._num_modes, 128)
        w_bands = jnp.concatenate([self.weights1, self.weights2], axis=2)
        w_flat = w_bands.reshape(in_channels, out_channels, self._num_modes)
        w_packed = jnp.concatenate([w_flat.real, w_flat.imag], axis=1)
        self._w_packed = jnp.pad(
            w_packed, ((0, 0), (0, 0), (0, self._mpad - self._num_modes))
        ).astype(jnp.float32)                     # (Cin, 2*Cout, Mpad)

    def __call__(self, x):
        # x: (B, Cin, H, W) float32   (NCHW, same as PyTorch)
        b, _, h, w = x.shape
        m1, m2 = self.modes1, self.modes2
        cin, cout = self.in_channels, self.out_channels
        n_modes, mpad = self._num_modes, self._mpad

        # TODO(synk): rfft2/irfft2 have no Pallas primitive; done in plain JAX.
        x_ft = jnp.fft.rfft2(x)                                  # (B,Cin,H,W//2+1)

        # Low + high frequency bands, modes already trailing -> no transpose.
        x_bands = jnp.concatenate(
            [x_ft[:, :, :m1, :m2], x_ft[:, :, -m1:, :m2]], axis=2)   # (B,Cin,2m1,m2)
        x_flat = x_bands.reshape(b, cin, n_modes)
        xs = jnp.concatenate([x_flat.real, x_flat.imag], axis=1)     # (B,2Cin,M)
        xs = jnp.pad(xs, ((0, 0), (0, 0), (0, mpad - n_modes))).astype(jnp.float32)

        out = spectral_mul_pallas(xs, self._w_packed, cin, cout)     # (B,2Cout,Mpad)

        out = out[:, :, :n_modes]
        out_c = jax.lax.complex(out[:, :cout, :], out[:, cout:, :])  # (B,Cout,M)
        out_bands = out_c.reshape(b, cout, 2 * m1, m2)

        out_ft = jnp.zeros((b, cout, h, w // 2 + 1), dtype=jnp.complex64)
        out_ft = out_ft.at[:, :, :m1, :m2].set(out_bands[:, :, :m1, :])
        out_ft = out_ft.at[:, :, -m1:, :m2].set(out_bands[:, :, m1:, :])

        return jnp.fft.irfft2(out_ft, s=(h, w))                      # (B,Cout,H,W)


# --------------------------------------------------------------------------- #
# Reference + test                                                            #
# --------------------------------------------------------------------------- #
def _reference_forward(x, w1, w2, modes1, modes2, out_channels):
    """Pure-JAX reference of the PyTorch forward pass (for correctness check)."""
    b, _, h, w = x.shape
    x_ft = jnp.fft.rfft2(x)
    out_ft = jnp.zeros((b, out_channels, h, w // 2 + 1), dtype=jnp.complex64)
    lo = jnp.einsum('bixy,ioxy->boxy', x_ft[:, :, :modes1, :modes2], w1)
    hi = jnp.einsum('bixy,ioxy->boxy', x_ft[:, :, -modes1:, :modes2], w2)
    out_ft = out_ft.at[:, :, :modes1, :modes2].set(lo)
    out_ft = out_ft.at[:, :, -modes1:, :modes2].set(hi)
    return jnp.fft.irfft2(out_ft, s=(h, w))


if __name__ == "__main__":
    key = jax.random.PRNGKey(0)
    k_x, k_w = jax.random.split(key)

    B, Cin, Cout, H, W = 2, 4, 4, 16, 16
    modes1, modes2 = 4, 4

    x = jax.random.normal(k_x, (B, Cin, H, W), dtype=jnp.float32)

    layer = SpectralConv2d(Cin, Cout, modes1, modes2, k_w)

    out = layer(x)
    out = jax.block_until_ready(out)

    ref = _reference_forward(x, layer.weights1, layer.weights2,
                             modes1, modes2, Cout)
    ref = jax.block_until_ready(ref)

    assert out.shape == (B, Cout, H, W)
    assert jnp.allclose(out, ref, atol=1e-4, rtol=1e-4)

    print("KERNEL_OK")
</pallas_src>

<mosaic_0001>
module attributes {stable_mosaic.version = 11 : i64} {
  func.func @_spectral_mul_kernel(%arg0: i32, %arg1: memref<2x8x128xf32, #tpu.memory_space<vmem>>, %arg2: memref<4x8x128xf32, #tpu.memory_space<vmem>>, %arg3: memref<2x8x128xf32, #tpu.memory_space<vmem>>) attributes {dimension_semantics = [#tpu.dimension_semantics<parallel>], iteration_bounds = array<i64: 1>, scalar_prefetch = 0 : i64, scratch_operands = 0 : i64, tpu.core_type = #tpu.core_type<tc>, window_params = [{transform_indices = @transform_0, window_bounds = array<i64: 2, 8, 128>}, {transform_indices = @transform_1, window_bounds = array<i64: 4, 8, 128>}, {transform_indices = @transform_2, window_bounds = array<i64: 2, 8, 128>}]} {
    %c0 = arith.constant 0 : index
    %c0_0 = arith.constant 0 : index
    %c0_1 = arith.constant 0 : index
    %0 = vector.load %arg1[%c0, %c0_0, %c0_1] : memref<2x8x128xf32, #tpu.memory_space<vmem>>, vector<2x8x128xf32>
    %c0_2 = arith.constant 0 : index
    %c0_3 = arith.constant 0 : index
    %c0_4 = arith.constant 0 : index
    %1 = vector.load %arg2[%c0_2, %c0_3, %c0_4] : memref<4x8x128xf32, #tpu.memory_space<vmem>>, vector<4x8x128xf32>
    %cst = arith.constant 0.000000e+00 : f32
    %2 = vector.broadcast %cst : f32 to vector<2x4x128xf32>
    %cst_5 = arith.constant 0.000000e+00 : f32
    %3 = vector.broadcast %cst_5 : f32 to vector<2x4x128xf32>
    %4 = vector.extract_strided_slice %0 {offsets = [0, 0, 0], sizes = [2, 1, 128], strides = [1, 1, 1]} : vector<2x8x128xf32> to vector<2x1x128xf32>
    %5 = vector.extract_strided_slice %0 {offsets = [0, 4, 0], sizes = [2, 1, 128], strides = [1, 1, 1]} : vector<2x8x128xf32> to vector<2x1x128xf32>
    %6 = vector.extract_strided_slice %1 {offsets = [0, 0, 0], sizes = [1, 4, 128], strides = [1, 1, 1]} : vector<4x8x128xf32> to vector<1x4x128xf32>
    %7 = vector.extract_strided_slice %1 {offsets = [0, 4, 0], sizes = [1, 4, 128], strides = [1, 1, 1]} : vector<4x8x128xf32> to vector<1x4x128xf32>
    %8 = vector.broadcast %4 : vector<2x1x128xf32> to vector<2x4x128xf32>
    %9 = vector.broadcast %6 : vector<1x4x128xf32> to vector<2x4x128xf32>
    %10 = arith.mulf %8, %9 : vector<2x4x128xf32>
    %11 = arith.addf %2, %10 : vector<2x4x128xf32>
    %12 = vector.broadcast %5 : vector<2x1x128xf32> to vector<2x4x128xf32>
    %13 = vector.broadcast %7 : vector<1x4x128xf32> to vector<2x4x128xf32>
    %14 = arith.mulf %12, %13 : vector<2x4x128xf32>
    %15 = arith.subf %11, %14 : vector<2x4x128xf32>
    %16 = vector.broadcast %4 : vector<2x1x128xf32> to vector<2x4x128xf32>
    %17 = vector.broadcast %7 : vector<1x4x128xf32> to vector<2x4x128xf32>
    %18 = arith.mulf %16, %17 : vector<2x4x128xf32>
    %19 = arith.addf %3, %18 : vector<2x4x128xf32>
    %20 = vector.broadcast %5 : vector<2x1x128xf32> to vector<2x4x128xf32>
    %21 = vector.broadcast %6 : vector<1x4x128xf32> to vector<2x4x128xf32>
    %22 = arith.mulf %20, %21 : vector<2x4x128xf32>
    %23 = arith.addf %19, %22 : vector<2x4x128xf32>
    %24 = vector.extract_strided_slice %0 {offsets = [0, 1, 0], sizes = [2, 1, 128], strides = [1, 1, 1]} : vector<2x8x128xf32> to vector<2x1x128xf32>
    %25 = vector.extract_strided_slice %0 {offsets = [0, 5, 0], sizes = [2, 1, 128], strides = [1, 1, 1]} : vector<2x8x128xf32> to vector<2x1x128xf32>
    %26 = vector.extract_strided_slice %1 {offsets = [1, 0, 0], sizes = [1, 4, 128], strides = [1, 1, 1]} : vector<4x8x128xf32> to vector<1x4x128xf32>
    %27 = vector.extract_strided_slice %1 {offsets = [1, 4, 0], sizes = [1, 4, 128], strides = [1, 1, 1]} : vector<4x8x128xf32> to vector<1x4x128xf32>
    %28 = vector.broadcast %24 : vector<2x1x128xf32> to vector<2x4x128xf32>
    %29 = vector.broadcast %26 : vector<1x4x128xf32> to vector<2x4x128xf32>
    %30 = arith.mulf %28, %29 : vector<2x4x128xf32>
    %31 = arith.addf %15, %30 : vector<2x4x128xf32>
    %32 = vector.broadcast %25 : vector<2x1x128xf32> to vector<2x4x128xf32>
    %33 = vector.broadcast %27 : vector<1x4x128xf32> to vector<2x4x128xf32>
    %34 = arith.mulf %32, %33 : vector<2x4x128xf32>
    %35 = arith.subf %31, %34 : vector<2x4x128xf32>
    %36 = vector.broadcast %24 : vector<2x1x128xf32> to vector<2x4x128xf32>
    %37 = vector.broadcast %27 : vector<1x4x128xf32> to vector<2x4x128xf32>
    %38 = arith.mulf %36, %37 : vector<2x4x128xf32>
    %39 = arith.addf %23, %38 : vector<2x4x128xf32>
    %40 = vector.broadcast %25 : vector<2x1x128xf32> to vector<2x4x128xf32>
    %41 = vector.broadcast %26 : vector<1x4x128xf32> to vector<2x4x128xf32>
    %42 = arith.mulf %40, %41 : vector<2x4x128xf32>
    %43 = arith.addf %39, %42 : vector<2x4x128xf32>
    %44 = vector.extract_strided_slice %0 {offsets = [0, 2, 0], sizes = [2, 1, 128], strides = [1, 1, 1]} : vector<2x8x128xf32> to vector<2x1x128xf32>
    %45 = vector.extract_strided_slice %0 {offsets = [0, 6, 0], sizes = [2, 1, 128], strides = [1, 1, 1]} : vector<2x8x128xf32> to vector<2x1x128xf32>
    %46 = vector.extract_strided_slice %1 {offsets = [2, 0, 0], sizes = [1, 4, 128], strides = [1, 1, 1]} : vector<4x8x128xf32> to vector<1x4x128xf32>
    %47 = vector.extract_strided_slice %1 {offsets = [2, 4, 0], sizes = [1, 4, 128], strides = [1, 1, 1]} : vector<4x8x128xf32> to vector<1x4x128xf32>
    %48 = vector.broadcast %44 : vector<2x1x128xf32> to vector<2x4x128xf32>
    %49 = vector.broadcast %46 : vector<1x4x128xf32> to vector<2x4x128xf32>
    %50 = arith.mulf %48, %49 : vector<2x4x128xf32>
    %51 = arith.addf %35, %50 : vector<2x4x128xf32>
    %52 = vector.broadcast %45 : vector<2x1x128xf32> to vector<2x4x128xf32>
    %53 = vector.broadcast %47 : vector<1x4x128xf32> to vector<2x4x128xf32>
    %54 = arith.mulf %52, %53 : vector<2x4x128xf32>
    %55 = arith.subf %51, %54 : vector<2x4x128xf32>
    %56 = vector.broadcast %44 : vector<2x1x128xf32> to vector<2x4x128xf32>
    %57 = vector.broadcast %47 : vector<1x4x128xf32> to vector<2x4x128xf32>
    %58 = arith.mulf %56, %57 : vector<2x4x128xf32>
    %59 = arith.addf %43, %58 : vector<2x4x128xf32>
    %60 = vector.broadcast %45 : vector<2x1x128xf32> to vector<2x4x128xf32>
    %61 = vector.broadcast %46 : vector<1x4x128xf32> to vector<2x4x128xf32>
    %62 = arith.mulf %60, %61 : vector<2x4x128xf32>
    %63 = arith.addf %59, %62 : vector<2x4x128xf32>
    %64 = vector.extract_strided_slice %0 {offsets = [0, 3, 0], sizes = [2, 1, 128], strides = [1, 1, 1]} : vector<2x8x128xf32> to vector<2x1x128xf32>
    %65 = vector.extract_strided_slice %0 {offsets = [0, 7, 0], sizes = [2, 1, 128], strides = [1, 1, 1]} : vector<2x8x128xf32> to vector<2x1x128xf32>
    %66 = vector.extract_strided_slice %1 {offsets = [3, 0, 0], sizes = [1, 4, 128], strides = [1, 1, 1]} : vector<4x8x128xf32> to vector<1x4x128xf32>
    %67 = vector.extract_strided_slice %1 {offsets = [3, 4, 0], sizes = [1, 4, 128], strides = [1, 1, 1]} : vector<4x8x128xf32> to vector<1x4x128xf32>
    %68 = vector.broadcast %64 : vector<2x1x128xf32> to vector<2x4x128xf32>
    %69 = vector.broadcast %66 : vector<1x4x128xf32> to vector<2x4x128xf32>
    %70 = arith.mulf %68, %69 : vector<2x4x128xf32>
    %71 = arith.addf %55, %70 : vector<2x4x128xf32>
    %72 = vector.broadcast %65 : vector<2x1x128xf32> to vector<2x4x128xf32>
    %73 = vector.broadcast %67 : vector<1x4x128xf32> to vector<2x4x128xf32>
    %74 = arith.mulf %72, %73 : vector<2x4x128xf32>
    %75 = arith.subf %71, %74 : vector<2x4x128xf32>
    %76 = vector.broadcast %64 : vector<2x1x128xf32> to vector<2x4x128xf32>
    %77 = vector.broadcast %67 : vector<1x4x128xf32> to vector<2x4x128xf32>
    %78 = arith.mulf %76, %77 : vector<2x4x128xf32>
    %79 = arith.addf %63, %78 : vector<2x4x128xf32>
    %80 = vector.broadcast %65 : vector<2x1x128xf32> to vector<2x4x128xf32>
    %81 = vector.broadcast %66 : vector<1x4x128xf32> to vector<2x4x128xf32>
    %82 = arith.mulf %80, %81 : vector<2x4x128xf32>
    %83 = arith.addf %79, %82 : vector<2x4x128xf32>
    %84 = tpu.concatenate %75, %83 in 1 : vector<2x4x128xf32>, vector<2x4x128xf32> -> vector<2x8x128xf32>
    %c0_6 = arith.constant 0 : index
    %c0_7 = arith.constant 0 : index
    %c0_8 = arith.constant 0 : index
    %85 = vector.load %arg3[%c0_6, %c0_7, %c0_8] : memref<2x8x128xf32, #tpu.memory_space<vmem>>, vector<2x8x128xf32>
    tpu.vector_store %arg3[%c0_6, %c0_7, %c0_8], %84 {strides = array<i32>} : memref<2x8x128xf32, #tpu.memory_space<vmem>>, vector<2x8x128xf32>,
    return
  }
  func.func @transform_0(%arg0: i32) -> (i32, i32, i32) {
    %c0_i32 = arith.constant 0 : i32
    %c0_i32_0 = arith.constant 0 : i32
    %c0_i32_1 = arith.constant 0 : i32
    return %c0_i32, %c0_i32_0, %arg0 : i32, i32, i32
  }
  func.func @transform_1(%arg0: i32) -> (i32, i32, i32) {
    %c0_i32 = arith.constant 0 : i32
    %c0_i32_0 = arith.constant 0 : i32
    %c0_i32_1 = arith.constant 0 : i32
    return %c0_i32, %c0_i32_0, %arg0 : i32, i32, i32
  }
  func.func @transform_2(%arg0: i32) -> (i32, i32, i32) {
    %c0_i32 = arith.constant 0 : i32
    %c0_i32_0 = arith.constant 0 : i32
    %c0_i32_1 = arith.constant 0 : i32
    return %c0_i32, %c0_i32_0, %arg0 : i32, i32, i32
  }
}

</mosaic_0001>

<llo_original>
// kernel: tpu_custom_call.1
$region0: #{tpu_custom_call.1}
  #allocation0 [shape = 'u32[]', space=smem, size = 0x4, offset = 0x4, fixed_abs, tag = 'smem constant byte address 0x4 - core index']
  #allocation1 [shape = 'u32[144,128]{1,0:T(1,128)}', space=vmem, size = 0x12000, scoped, tag = 'internal scratch']
  %s0 = inlined_call_operand.hbm [shape: f32[2,8,128], index: 0, kind: input, shape index: {}]
  %s1 = inlined_call_operand.hbm [shape: f32[4,8,128], index: 1, kind: input, shape index: {}]
  %s2 = inlined_call_operand.hbm [shape: f32[2,8,128], index: 2, kind: output, shape index: {}]
  %s3 = sld [smem:[#allocation0]]
  $region26: #{tpu_custom_call.1} parent=0
    _
  %s5 = ssub.s32 1, %s3
  %s6 = scalar_select 0, %s5, %s3
  $region1: #{tpu_custom_call.1} parent=0
    #allocation2 [shape = 'u8[8192]{0}', space=vmem, size = 0x2000, scoped, tag = 'input window, operand 0, single buffered']
    #allocation3 [shape = 's32[1]{0}', space=sflag, size = 0x4, scoped, tag = 'scoped memory for tpu_custom_call.1']
    #allocation4 [shape = 's32[1]{0}', space=sflag, size = 0x4, scoped, tag = 'scoped memory for tpu_custom_call.1']
    #allocation5 [shape = 'u8[16384]{0}', space=vmem, size = 0x4000, scoped, tag = 'input window, operand 1, single buffered']
    #allocation6 [shape = 's32[1]{0}', space=sflag, size = 0x4, scoped, tag = 'scoped memory for tpu_custom_call.1']
    #allocation7 [shape = 'u8[8192]{0}', space=vmem, size = 0x2000, scoped, tag = 'output window, operand 0, single buffered']
    %7 = vsyncpa [#allocation3], 0
    %8 = vsyncpa [#allocation6], 0
    %9 = vsyncpa [#allocation4], 0
    // Predicated region
    $region2: #{tpu_custom_call.1} parent=1 // pred_check
      _
    $region3: #{tpu_custom_call.1} parent=1 // pred_check_branch
      %11 = sbr.rel (0) target = $region5
    $region4: #{tpu_custom_call.1} parent=1 // pred_region
      %s13 = ssub.s32 256, 256
      %14 = vsyncadd [#allocation3], %s13
      %s15 = sshll.u32 [#allocation2], 4
      %s16 = int_to_ptr.vmem [resolvable:$true] %s15
      %21 = dma.hbm_to_vmem [thread:$0]  %s0, 256, %s16, [#allocation3], 128, 128, 8
    $region5: #{tpu_custom_call.1} parent=1 // pred_fallthru
      _
    // Predicated region
    $region6: #{tpu_custom_call.1} parent=1 // pred_check
      _
    $region7: #{tpu_custom_call.1} parent=1 // pred_check_branch
      %23 = sbr.rel (0) target = $region9
    $region8: #{tpu_custom_call.1} parent=1 // pred_region
      %s25 = ssub.s32 512, 512
      %26 = vsyncadd [#allocation6], %s25
      %s27 = sshll.u32 [#allocation5], 4
      %s28 = int_to_ptr.vmem [resolvable:$true] %s27
      %33 = dma.hbm_to_vmem [thread:$0]  %s1, 512, %s28, [#allocation6], 128, 128, 8
    $region9: #{tpu_custom_call.1} parent=1 // pred_fallthru
      _
    // Predicated region
    $region10: #{tpu_custom_call.1} parent=1 // pred_check
      _
    $region11: #{tpu_custom_call.1} parent=1 // pred_check_branch
      %35 = sbr.rel (0) target = $region13
    $region12: #{tpu_custom_call.1} parent=1 // pred_region
      %36 = dma.done [#allocation3], 256
    $region13: #{tpu_custom_call.1} parent=1 // pred_fallthru
      _
    // Predicated region
    $region14: #{tpu_custom_call.1} parent=1 // pred_check
      _
    $region15: #{tpu_custom_call.1} parent=1 // pred_check_branch
      %38 = sbr.rel (0) target = $region17
    $region16: #{tpu_custom_call.1} parent=1 // pred_region
      %39 = dma.done [#allocation6], 512
    $region17: #{tpu_custom_call.1} parent=1 // pred_fallthru
      _
    %v40 = vld [vmem:[#allocation2] sm:$0xff]
    %v41 = vld [vmem:[#allocation2 + $0x8] sm:$0xff]
    %v42 = vld [vmem:[#allocation5] sm:$0xff]
    %v43 = vld [vmem:[#allocation5 + $0x8] sm:$0xff]
    %v44 = vld [vmem:[#allocation5 + $0x10] sm:$0xff]
    %v45 = vld [vmem:[#allocation5 + $0x18] sm:$0xff]
    %v46 = vlaneseq
    %v47 = vshrl.u32 %v46, 7
    %v48 = vsub.s32 0, %v47
    %v49 = vrot.slane %v40, %v48
    %v50 = vlaneseq
    %v51 = vshrl.u32 %v50, 7
    %v52 = vsub.s32 0, %v51
    %v53 = vrot.slane %v41, %v52
    %v54 = vmul.f32 %v49, %v42
    %v55 = vmul.f32 %v53, %v42
    %v56 = vadd.f32 %v54, 0.0
    %v57 = vadd.f32 %v55, 0.0
    %v58 = vlaneseq
    %v59 = vshrl.u32 %v58, 7
    %v60 = vsub.s32 4, %v59
    %v61 = vrot.slane %v40, %v60
    %v62 = vlaneseq
    %v63 = vshrl.u32 %v62, 7
    %v64 = vsub.s32 4, %v63
    %v65 = vrot.slane %v41, %v64
    %v66 = vmul.f32 %v61, %v42
    %v67 = vmul.f32 %v65, %v42
    %v70 = vrot.slane %v66, 4
    %v71 = vrot.slane %v67, 4
    %v74 = vsub.f32 %v56, %v70
    %v75 = vsub.f32 %v57, %v71
    %v76 = vadd.f32 %v56, %v70
    %v77 = vadd.f32 %v57, %v71
    %v78 = vlaneseq
    %v79 = vshrl.u32 %v78, 7
    %v80 = vsub.s32 1, %v79
    %v81 = vrot.slane %v40, %v80
    %v82 = vlaneseq
    %v83 = vshrl.u32 %v82, 7
    %v84 = vsub.s32 1, %v83
    %v85 = vrot.slane %v41, %v84
    %v86 = vmul.f32 %v81, %v43
    %v87 = vmul.f32 %v85, %v43
    %v88 = vadd.f32 %v74, %v86
    %v89 = vadd.f32 %v75, %v87
    %v90 = vlaneseq
    %v91 = vshrl.u32 %v90, 7
    %v92 = vsub.s32 5, %v91
    %v93 = vrot.slane %v40, %v92
    %v94 = vlaneseq
    %v95 = vshrl.u32 %v94, 7
    %v96 = vsub.s32 5, %v95
    %v97 = vrot.slane %v41, %v96
    %v98 = vmul.f32 %v93, %v43
    %v99 = vmul.f32 %v97, %v43
    %v102 = vrot.slane %v98, 4
    %v103 = vrot.slane %v99, 4
    %v106 = vsub.f32 %v88, %v102
    %v107 = vsub.f32 %v89, %v103
    %v108 = vadd.f32 %v76, %v86
    %v109 = vadd.f32 %v77, %v87
    %v110 = vadd.f32 %v108, %v102
    %v111 = vadd.f32 %v109, %v103
    %v112 = vlaneseq
    %v113 = vshrl.u32 %v112, 7
    %v114 = vsub.s32 2, %v113
    %v115 = vrot.slane %v40, %v114
    %v116 = vlaneseq
    %v117 = vshrl.u32 %v116, 7
    %v118 = vsub.s32 2, %v117
    %v119 = vrot.slane %v41, %v118
    %v120 = vmul.f32 %v115, %v44
    %v121 = vmul.f32 %v119, %v44
    %v122 = vadd.f32 %v106, %v120
    %v123 = vadd.f32 %v107, %v121
    %v124 = vlaneseq
    %v125 = vshrl.u32 %v124, 7
    %v126 = vsub.s32 6, %v125
    %v127 = vrot.slane %v40, %v126
    %v128 = vlaneseq
    %v129 = vshrl.u32 %v128, 7
    %v130 = vsub.s32 6, %v129
    %v131 = vrot.slane %v41, %v130
    %v132 = vmul.f32 %v127, %v44
    %v133 = vmul.f32 %v131, %v44
    %v136 = vrot.slane %v132, 4
    %v137 = vrot.slane %v133, 4
    %v140 = vsub.f32 %v122, %v136
    %v141 = vsub.f32 %v123, %v137
    %v142 = vadd.f32 %v110, %v120
    %v143 = vadd.f32 %v111, %v121
    %v144 = vadd.f32 %v142, %v136
    %v145 = vadd.f32 %v143, %v137
    %v146 = vlaneseq
    %v147 = vshrl.u32 %v146, 7
    %v148 = vsub.s32 3, %v147
    %v149 = vrot.slane %v40, %v148
    %v150 = vlaneseq
    %v151 = vshrl.u32 %v150, 7
    %v152 = vsub.s32 3, %v151
    %v153 = vrot.slane %v41, %v152
    %v154 = vmul.f32 %v149, %v45
    %v155 = vmul.f32 %v153, %v45
    %v156 = vadd.f32 %v140, %v154
    %v157 = vadd.f32 %v141, %v155
    %v158 = vlaneseq
    %v159 = vshrl.u32 %v158, 7
    %v160 = vsub.s32 7, %v159
    %v161 = vrot.slane %v40, %v160
    %v162 = vlaneseq
    %v163 = vshrl.u32 %v162, 7
    %v164 = vsub.s32 7, %v163
    %v165 = vrot.slane %v41, %v164
    %v166 = vmul.f32 %v161, %v45
    %v167 = vmul.f32 %v165, %v45
    %v170 = vrot.slane %v166, 4
    %v171 = vrot.slane %v167, 4
    %v174 = vsub.f32 %v156, %v170
    %v175 = vsub.f32 %v157, %v171
    %v176 = vadd.f32 %v144, %v154
    %v177 = vadd.f32 %v145, %v155
    %v178 = vadd.f32 %v176, %v170
    %v179 = vadd.f32 %v177, %v171
    %vm180 = vcmask 1043456
    %v181 = vsel %vm180, %v174, %v178
    %v182 = vsel %vm180, %v175, %v179
    %183 = vst [vmem:[#allocation7] sm:$0xff] %v181
    %184 = vst [vmem:[#allocation7 + $0x8] sm:$0xff] %v182
    // Predicated region
    $region18: #{tpu_custom_call.1} parent=1 // pred_check
      _
    $region19: #{tpu_custom_call.1} parent=1 // pred_check_branch
      %186 = sbr.rel (0) target = $region21
    $region20: #{tpu_custom_call.1} parent=1 // pred_region
      %s188 = ssub.s32 256, 256
      %189 = vsyncadd [#allocation4], %s188
      %s190 = sshll.u32 [#allocation7], 4
      %s191 = int_to_ptr.vmem [resolvable:$true] %s190
      %196 = dma.vmem_to_hbm [thread:$0]  %s191, 256, %s2, [#allocation4], 128, 128, 8
    $region21: #{tpu_custom_call.1} parent=1 // pred_fallthru
      _
    // Predicated region
    $region22: #{tpu_custom_call.1} parent=1 // pred_check
      _
    $region23: #{tpu_custom_call.1} parent=1 // pred_check_branch
      %198 = sbr.rel (0) target = $region25
    $region24: #{tpu_custom_call.1} parent=1 // pred_region
      %199 = dma.done [#allocation4], 256
    $region25: #{tpu_custom_call.1} parent=1 // pred_fallthru
      _
    %200 = vsyncpa [#allocation3], 1
    %201 = vsyncpa [#allocation6], 1
    %202 = vsyncpa [#allocation4], 1

</llo_original>
